<compile_context>
chip_gen: v5e
topology: v5e:2x2
jax: 0.10.0
libtpu: 0.0.40
codegen_flags: <defaults>
</compile_context>

<pallas_src>
import functools

import jax
import jax.numpy as jnp
from jax.experimental import pallas as pl
from jax.experimental.pallas import tpu as pltpu

NEG_SLOPE = 0.01   # PyTorch nn.LeakyReLU default
BN_EPS = 1e-5      # PyTorch nn.BatchNorm1d default


# ----------------------------- kernel helpers -----------------------------

def _shift_prev(v):
    """v[c, l] -> v[c, l-1] with a zero column at l == 0 (no wraparound)."""
    c, l = v.shape
    z = jnp.zeros((c, 1), v.dtype)
    return jnp.concatenate([z, v[:, : l - 1]], axis=1)


def _shift_next(v):
    """v[c, l] -> v[c, l+1] with a zero column at l == L-1 (no wraparound)."""
    c, l = v.shape
    z = jnp.zeros((c, 1), v.dtype)
    return jnp.concatenate([v[:, 1:], z], axis=1)


def _resblk_kernel(x_ref, w1_ref, b1_ref, w2_ref, b2_ref, o_ref, *,
                   batch_block, has_shortcut_conv, compute_dtype, neg_slope):
    """One grid step = `batch_block` sequences, each kept in [C, L] layout.

    x_ref:  (B, C_in, L)
    w1_ref: (C_out, 3*C_in)            conv1 (+BN1 folded), taps stacked along K
    b1_ref: (C_out, 1)                 f32
    w2_ref: (C_out, 3*C_out[+C_in])    conv2 (+BN2 folded) [+ 1x1 shortcut] stacked
    b2_ref: (C_out, 1)                 f32 (BN2 bias [+ shortcut bias])
    o_ref:  (B, C_out, L)
    """
    w1 = w1_ref[...]
    w2 = w2_ref[...]
    b1 = b1_ref[...]
    b2 = b2_ref[...]

    def leaky(v):
        return jnp.where(v >= 0, v, neg_slope * v)

    for b in range(batch_block):
        x_f = x_ref[b].astype(jnp.float32)                       # (C_in, L)

        # conv1 + BN1 (folded) + LeakyReLU: im2col on sublanes -> ONE wide-K matmul.
        x_cat = jnp.concatenate(
            [_shift_prev(x_f), x_f, _shift_next(x_f)], axis=0)   # (3*C_in, L)
        h1 = jnp.dot(w1, x_cat.astype(compute_dtype),
                     preferred_element_type=jnp.float32) + b1    # (C_out, L) f32
        h1 = leaky(h1)

        # conv2 + BN2 (folded) [+ fused 1x1 shortcut conv] as ONE matmul.
        parts = [_shift_prev(h1), h1, _shift_next(h1)]
        if has_shortcut_conv:
            parts.append(x_f)                                    # shortcut as extra K
        h1_cat = jnp.concatenate(parts, axis=0)                  # (3*C_out[+C_in], L)
        h2 = jnp.dot(w2, h1_cat.astype(compute_dtype),
                     preferred_element_type=jnp.float32) + b2    # (C_out, L) f32

        if not has_shortcut_conv:
            # Identity shortcut: exact residual add, never routed through the MXU.
            h2 = h2 + x_f

        o_ref[b] = leaky(h2).astype(o_ref.dtype)


# ------------------------------- host wrapper ------------------------------

def _fold_bn(w, b, gamma, beta, mean, var, eps=BN_EPS):
    # conv(x)=Wx+b followed by eval-mode BN  ==  (s*W)x + (s*(b-mean) + beta)
    s = gamma / jnp.sqrt(var + eps)
    return w * s[:, None, None], (b - mean) * s + beta


@functools.partial(jax.jit, static_argnames=("batch_block", "compute_dtype"))
def resblk_pallas(x, params, *, batch_block=8, compute_dtype=jnp.bfloat16):
    """ResBlk forward (eval-mode BN). x: [N, C_in, L] -> [N, C_out, L] (same dtype)."""
    N, C_in, L = x.shape
    C_out = params["w1"].shape[0]
    has_shortcut_conv = params.get("wsc") is not None

    # Fold eval-mode BN into the conv weights/biases (weight-sized work only).
    w1f, b1f = _fold_bn(params["w1"], params["b1"], params["g1"], params["be1"],
                        params["m1"], params["v1"])
    w2f, b2f = _fold_bn(params["w2"], params["b2"], params["g2"], params["be2"],
                        params["m2"], params["v2"])

    # Tap-stacked weights: row = C_out, columns = [tap(-1)*C, tap(0)*C, tap(+1)*C].
    w1cat = w1f.transpose(0, 2, 1).reshape(C_out, 3 * C_in)
    w2cat = w2f.transpose(0, 2, 1).reshape(C_out, 3 * C_out)
    b2k = b2f
    if has_shortcut_conv:
        # Fuse the 1x1 shortcut conv into the stage-2 matmul (extra C_in columns of K).
        w2cat = jnp.concatenate([w2cat, params["wsc"][:, :, 0]], axis=1)
        b2k = b2k + params["bsc"]
    w1cat = w1cat.astype(compute_dtype)
    w2cat = w2cat.astype(compute_dtype)
    b1k = b1f.reshape(C_out, 1).astype(jnp.float32)
    b2k = b2k.reshape(C_out, 1).astype(jnp.float32)
    k2 = w2cat.shape[1]

    # Several sequences per grid step: amortizes the ~0.35us/step fixed overhead.
    B = min(batch_block, N)
    n_steps = -(-N // B)
    Np = n_steps * B
    x_in = jnp.pad(x, ((0, Np - N), (0, 0), (0, 0))) if Np != N else x

    kernel = functools.partial(
        _resblk_kernel, batch_block=B, has_shortcut_conv=has_shortcut_conv,
        compute_dtype=compute_dtype, neg_slope=NEG_SLOPE)

    out = pl.pallas_call(
        kernel,
        out_shape=jax.ShapeDtypeStruct((Np, C_out, L), x.dtype),
        grid=(n_steps,),
        in_specs=[
            pl.BlockSpec((B, C_in, L), lambda n: (n, 0, 0)),     # x (NCL, no transposes)
            pl.BlockSpec((C_out, 3 * C_in), lambda n: (0, 0)),   # conv1 + BN1 folded
            pl.BlockSpec((C_out, 1), lambda n: (0, 0)),
            pl.BlockSpec((C_out, k2), lambda n: (0, 0)),         # conv2 + BN2 (+shortcut)
            pl.BlockSpec((C_out, 1), lambda n: (0, 0)),
        ],
        out_specs=pl.BlockSpec((B, C_out, L), lambda n: (n, 0, 0)),
        compiler_params=pltpu.CompilerParams(dimension_semantics=("parallel",)),
    )(x_in, w1cat, b1k, w2cat, b2k)

    return out[:N] if Np != N else out


# ----------------------- pure-JAX reference (validation) -----------------------

def _conv1d_ref(x, w, b, padding):
    out = jax.lax.conv_general_dilated(
        x, w, window_strides=(1,), padding=[(padding, padding)],
        dimension_numbers=("NCH", "OIH", "NCH"))
    return out + b[None, :, None]


def _bn_ref(x, gamma, beta, mean, var, eps=BN_EPS):
    inv = gamma / jnp.sqrt(var + eps)
    return (x - mean[None, :, None]) * inv[None, :, None] + beta[None, :, None]


def _leaky_ref(x):
    return jnp.where(x >= 0, x, NEG_SLOPE * x)


def resblk_reference(x, p):
    out = _leaky_ref(_bn_ref(_conv1d_ref(x, p["w1"], p["b1"], 1),
                             p["g1"], p["be1"], p["m1"], p["v1"]))
    out = _bn_ref(_conv1d_ref(out, p["w2"], p["b2"], 1),
                  p["g2"], p["be2"], p["m2"], p["v2"])
    sc = _conv1d_ref(x, p["wsc"], p["bsc"], 0) if p.get("wsc") is not None else x
    return _leaky_ref(out + sc)


def _make_params(key, c_in, c_out, with_shortcut):
    ks = jax.random.split(key, 14)
    p = {
        "w1": 0.3 * jax.random.normal(ks[0], (c_out, c_in, 3), jnp.float32),
        "b1": 0.1 * jax.random.normal(ks[1], (c_out,), jnp.float32),
        "g1": 1.0 + 0.1 * jax.random.normal(ks[2], (c_out,), jnp.float32),
        "be1": 0.1 * jax.random.normal(ks[3], (c_out,), jnp.float32),
        "m1": 0.1 * jax.random.normal(ks[4], (c_out,), jnp.float32),
        "v1": 0.5 + jax.random.uniform(ks[5], (c_out,), jnp.float32),
        "w2": 0.3 * jax.random.normal(ks[6], (c_out, c_out, 3), jnp.float32),
        "b2": 0.1 * jax.random.normal(ks[7], (c_out,), jnp.float32),
        "g2": 1.0 + 0.1 * jax.random.normal(ks[8], (c_out,), jnp.float32),
        "be2": 0.1 * jax.random.normal(ks[9], (c_out,), jnp.float32),
        "m2": 0.1 * jax.random.normal(ks[10], (c_out,), jnp.float32),
        "v2": 0.5 + jax.random.uniform(ks[11], (c_out,), jnp.float32),
    }
    if with_shortcut:
        p["wsc"] = 0.3 * jax.random.normal(ks[12], (c_out, c_in, 1), jnp.float32)
        p["bsc"] = 0.1 * jax.random.normal(ks[13], (c_out,), jnp.float32)
    return p


if __name__ == "__main__":
    key = jax.random.PRNGKey(0)
    kp1, kx1, kp2, kx2 = jax.random.split(key, 4)

    # Case 1: C_in != C_out -> 1x1 conv shortcut fused into the stage-2 matmul.
    N, C_in, C_out, L = 2, 4, 8, 16
    p1 = _make_params(kp1, C_in, C_out, with_shortcut=True)
    x1 = jax.random.normal(kx1, (N, C_in, L), jnp.float32)

    y1 = jax.block_until_ready(resblk_pallas(x1, p1, compute_dtype=jnp.float32))
    y1_ref = resblk_reference(x1, p1)
    assert y1.shape == (N, C_out, L) and y1.dtype == jnp.float32
    err1 = float(jnp.max(jnp.abs(y1 - y1_ref)))
    assert jnp.allclose(y1, y1_ref, atol=1e-4, rtol=1e-4), f"f32 mismatch: {err1}"

    # Same case with bf16 MXU operands (f32 accumulation / VPU math): loose tolerance.
    y1b = jax.block_until_ready(resblk_pallas(x1, p1, compute_dtype=jnp.bfloat16))
    err1b = float(jnp.max(jnp.abs(y1b - y1_ref)))
    assert jnp.allclose(y1b, y1_ref, atol=1e-1, rtol=5e-2), f"bf16 mismatch: {err1b}"

    # Case 2: C_in == C_out -> identity shortcut (direct residual add); odd batch with
    # batch_block=2 also exercises the batch-padding path (grid of 2 steps).
    N2, C2, L2 = 3, 8, 16
    p2 = _make_params(kp2, C2, C2, with_shortcut=False)
    x2 = jax.random.normal(kx2, (N2, C2, L2), jnp.float32)

    y2 = jax.block_until_ready(
        resblk_pallas(x2, p2, batch_block=2, compute_dtype=jnp.float32))
    y2_ref = resblk_reference(x2, p2)
    assert y2.shape == (N2, C2, L2)
    err2 = float(jnp.max(jnp.abs(y2 - y2_ref)))
    assert jnp.allclose(y2, y2_ref, atol=1e-4, rtol=1e-4), f"identity mismatch: {err2}"

    print("KERNEL_OK")
</pallas_src>

<mosaic_0001>
module attributes {stable_mosaic.version = 11 : i64} {
  func.func @_resblk_kernel(%arg0: i32, %arg1: memref<2x4x16xf32, #tpu.memory_space<vmem>>, %arg2: memref<8x12xf32, #tpu.memory_space<vmem>>, %arg3: memref<8x1xf32, #tpu.memory_space<vmem>>, %arg4: memref<8x28xf32, #tpu.memory_space<vmem>>, %arg5: memref<8x1xf32, #tpu.memory_space<vmem>>, %arg6: memref<2x8x16xf32, #tpu.memory_space<vmem>>) attributes {dimension_semantics = [#tpu.dimension_semantics<parallel>], iteration_bounds = array<i64: 1>, scalar_prefetch = 0 : i64, scratch_operands = 0 : i64, tpu.core_type = #tpu.core_type<tc>, window_params = [{transform_indices = @transform_0, window_bounds = array<i64: 2, 4, 16>}, {pipeline_mode = #tpu.pipeline_mode<synchronous>, transform_indices = @transform_1, window_bounds = array<i64: 8, 12>}, {pipeline_mode = #tpu.pipeline_mode<synchronous>, transform_indices = @transform_2, window_bounds = array<i64: 8, 1>}, {pipeline_mode = #tpu.pipeline_mode<synchronous>, transform_indices = @transform_3, window_bounds = array<i64: 8, 28>}, {pipeline_mode = #tpu.pipeline_mode<synchronous>, transform_indices = @transform_4, window_bounds = array<i64: 8, 1>}, {transform_indices = @transform_5, window_bounds = array<i64: 2, 8, 16>}]} {
    %c0 = arith.constant 0 : index
    %c0_0 = arith.constant 0 : index
    %0 = vector.load %arg2[%c0, %c0_0] : memref<8x12xf32, #tpu.memory_space<vmem>>, vector<8x12xf32>
    %c0_1 = arith.constant 0 : index
    %c0_2 = arith.constant 0 : index
    %1 = vector.load %arg4[%c0_1, %c0_2] : memref<8x28xf32, #tpu.memory_space<vmem>>, vector<8x28xf32>
    %c0_3 = arith.constant 0 : index
    %c0_4 = arith.constant 0 : index
    %2 = vector.load %arg3[%c0_3, %c0_4] : memref<8x1xf32, #tpu.memory_space<vmem>>, vector<8x1xf32>
    %c0_5 = arith.constant 0 : index
    %c0_6 = arith.constant 0 : index
    %3 = vector.load %arg5[%c0_5, %c0_6] : memref<8x1xf32, #tpu.memory_space<vmem>>, vector<8x1xf32>
    %c0_7 = arith.constant 0 : index
    %c0_8 = arith.constant 0 : index
    %c0_9 = arith.constant 0 : index
    %4 = vector.load %arg1[%c0_7, %c0_8, %c0_9] : memref<2x4x16xf32, #tpu.memory_space<vmem>>, vector<1x4x16xf32>
    %5 = vector.shape_cast %4 : vector<1x4x16xf32> to vector<4x16xf32>
    %cst = arith.constant 0.000000e+00 : f32
    %6 = vector.broadcast %cst : f32 to vector<4x1xf32>
    %7 = vector.extract_strided_slice %5 {offsets = [0, 0], sizes = [4, 15], strides = [1, 1]} : vector<4x16xf32> to vector<4x15xf32>
    %8 = tpu.concatenate %6, %7 in 1 : vector<4x1xf32>, vector<4x15xf32> -> vector<4x16xf32>
    %cst_10 = arith.constant 0.000000e+00 : f32
    %9 = vector.broadcast %cst_10 : f32 to vector<4x1xf32>
    %10 = vector.extract_strided_slice %5 {offsets = [0, 1], sizes = [4, 15], strides = [1, 1]} : vector<4x16xf32> to vector<4x15xf32>
    %11 = tpu.concatenate %10, %9 in 1 : vector<4x15xf32>, vector<4x1xf32> -> vector<4x16xf32>
    %12 = tpu.concatenate %8, %5, %11 in 0 : vector<4x16xf32>, vector<4x16xf32>, vector<4x16xf32> -> vector<12x16xf32>
    %cst_11 = arith.constant dense<0.000000e+00> : vector<8x16xf32>
    %13 = tpu.matmul %0, %12, %cst_11 {dimension_numbers = #tpu.dot_dimension_numbers<[1], [0], [0], [1], [0, 0, 1, 1], [], []>} : vector<8x12xf32>, vector<12x16xf32>, vector<8x16xf32> -> vector<8x16xf32>
    %14 = vector.broadcast %2 : vector<8x1xf32> to vector<8x16xf32>
    %15 = arith.addf %13, %14 : vector<8x16xf32>
    %cst_12 = arith.constant 0.000000e+00 : f32
    %16 = vector.broadcast %cst_12 : f32 to vector<8x16xf32>
    %17 = arith.cmpf oge, %15, %16 : vector<8x16xf32>
    %cst_13 = arith.constant 0.00999999977 : f32
    %18 = vector.broadcast %cst_13 : f32 to vector<8x16xf32>
    %19 = arith.mulf %18, %15 : vector<8x16xf32>
    %20 = arith.select %17, %15, %19 : vector<8x16xi1>, vector<8x16xf32>
    %cst_14 = arith.constant 0.000000e+00 : f32
    %21 = vector.broadcast %cst_14 : f32 to vector<8x1xf32>
    %22 = vector.extract_strided_slice %20 {offsets = [0, 0], sizes = [8, 15], strides = [1, 1]} : vector<8x16xf32> to vector<8x15xf32>
    %23 = tpu.concatenate %21, %22 in 1 : vector<8x1xf32>, vector<8x15xf32> -> vector<8x16xf32>
    %cst_15 = arith.constant 0.000000e+00 : f32
    %24 = vector.broadcast %cst_15 : f32 to vector<8x1xf32>
    %25 = vector.extract_strided_slice %20 {offsets = [0, 1], sizes = [8, 15], strides = [1, 1]} : vector<8x16xf32> to vector<8x15xf32>
    %26 = tpu.concatenate %25, %24 in 1 : vector<8x15xf32>, vector<8x1xf32> -> vector<8x16xf32>
    %27 = tpu.concatenate %23, %20, %26, %5 in 0 : vector<8x16xf32>, vector<8x16xf32>, vector<8x16xf32>, vector<4x16xf32> -> vector<28x16xf32>
    %cst_16 = arith.constant dense<0.000000e+00> : vector<8x16xf32>
    %28 = tpu.matmul %1, %27, %cst_16 {dimension_numbers = #tpu.dot_dimension_numbers<[1], [0], [0], [1], [0, 0, 1, 1], [], []>} : vector<8x28xf32>, vector<28x16xf32>, vector<8x16xf32> -> vector<8x16xf32>
    %29 = vector.broadcast %3 : vector<8x1xf32> to vector<8x16xf32>
    %30 = arith.addf %28, %29 : vector<8x16xf32>
    %cst_17 = arith.constant 0.000000e+00 : f32
    %31 = vector.broadcast %cst_17 : f32 to vector<8x16xf32>
    %32 = arith.cmpf oge, %30, %31 : vector<8x16xf32>
    %cst_18 = arith.constant 0.00999999977 : f32
    %33 = vector.broadcast %cst_18 : f32 to vector<8x16xf32>
    %34 = arith.mulf %33, %30 : vector<8x16xf32>
    %35 = arith.select %32, %30, %34 : vector<8x16xi1>, vector<8x16xf32>
    %c0_19 = arith.constant 0 : index
    %c0_20 = arith.constant 0 : index
    %c0_21 = arith.constant 0 : index
    %36 = vector.load %arg6[%c0_19, %c0_20, %c0_21] : memref<2x8x16xf32, #tpu.memory_space<vmem>>, vector<1x8x16xf32>
    %37 = vector.shape_cast %36 : vector<1x8x16xf32> to vector<8x16xf32>
    %38 = vector.shape_cast %35 : vector<8x16xf32> to vector<1x8x16xf32>
    tpu.vector_store %arg6[%c0_19, %c0_20, %c0_21], %38 {strides = array<i32>} : memref<2x8x16xf32, #tpu.memory_space<vmem>>, vector<1x8x16xf32>,
    %c1 = arith.constant 1 : index
    %c0_22 = arith.constant 0 : index
    %c0_23 = arith.constant 0 : index
    %39 = vector.load %arg1[%c1, %c0_22, %c0_23] : memref<2x4x16xf32, #tpu.memory_space<vmem>>, vector<1x4x16xf32>
    %40 = vector.shape_cast %39 : vector<1x4x16xf32> to vector<4x16xf32>
    %cst_24 = arith.constant 0.000000e+00 : f32
    %41 = vector.broadcast %cst_24 : f32 to vector<4x1xf32>
    %42 = vector.extract_strided_slice %40 {offsets = [0, 0], sizes = [4, 15], strides = [1, 1]} : vector<4x16xf32> to vector<4x15xf32>
    %43 = tpu.concatenate %41, %42 in 1 : vector<4x1xf32>, vector<4x15xf32> -> vector<4x16xf32>
    %cst_25 = arith.constant 0.000000e+00 : f32
    %44 = vector.broadcast %cst_25 : f32 to vector<4x1xf32>
    %45 = vector.extract_strided_slice %40 {offsets = [0, 1], sizes = [4, 15], strides = [1, 1]} : vector<4x16xf32> to vector<4x15xf32>
    %46 = tpu.concatenate %45, %44 in 1 : vector<4x15xf32>, vector<4x1xf32> -> vector<4x16xf32>
    %47 = tpu.concatenate %43, %40, %46 in 0 : vector<4x16xf32>, vector<4x16xf32>, vector<4x16xf32> -> vector<12x16xf32>
    %cst_26 = arith.constant dense<0.000000e+00> : vector<8x16xf32>
    %48 = tpu.matmul %0, %47, %cst_26 {dimension_numbers = #tpu.dot_dimension_numbers<[1], [0], [0], [1], [0, 0, 1, 1], [], []>} : vector<8x12xf32>, vector<12x16xf32>, vector<8x16xf32> -> vector<8x16xf32>
    %49 = vector.broadcast %2 : vector<8x1xf32> to vector<8x16xf32>
    %50 = arith.addf %48, %49 : vector<8x16xf32>
    %cst_27 = arith.constant 0.000000e+00 : f32
    %51 = vector.broadcast %cst_27 : f32 to vector<8x16xf32>
    %52 = arith.cmpf oge, %50, %51 : vector<8x16xf32>
    %cst_28 = arith.constant 0.00999999977 : f32
    %53 = vector.broadcast %cst_28 : f32 to vector<8x16xf32>
    %54 = arith.mulf %53, %50 : vector<8x16xf32>
    %55 = arith.select %52, %50, %54 : vector<8x16xi1>, vector<8x16xf32>
    %cst_29 = arith.constant 0.000000e+00 : f32
    %56 = vector.broadcast %cst_29 : f32 to vector<8x1xf32>
    %57 = vector.extract_strided_slice %55 {offsets = [0, 0], sizes = [8, 15], strides = [1, 1]} : vector<8x16xf32> to vector<8x15xf32>
    %58 = tpu.concatenate %56, %57 in 1 : vector<8x1xf32>, vector<8x15xf32> -> vector<8x16xf32>
    %cst_30 = arith.constant 0.000000e+00 : f32
    %59 = vector.broadcast %cst_30 : f32 to vector<8x1xf32>
    %60 = vector.extract_strided_slice %55 {offsets = [0, 1], sizes = [8, 15], strides = [1, 1]} : vector<8x16xf32> to vector<8x15xf32>
    %61 = tpu.concatenate %60, %59 in 1 : vector<8x15xf32>, vector<8x1xf32> -> vector<8x16xf32>
    %62 = tpu.concatenate %58, %55, %61, %40 in 0 : vector<8x16xf32>, vector<8x16xf32>, vector<8x16xf32>, vector<4x16xf32> -> vector<28x16xf32>
    %cst_31 = arith.constant dense<0.000000e+00> : vector<8x16xf32>
    %63 = tpu.matmul %1, %62, %cst_31 {dimension_numbers = #tpu.dot_dimension_numbers<[1], [0], [0], [1], [0, 0, 1, 1], [], []>} : vector<8x28xf32>, vector<28x16xf32>, vector<8x16xf32> -> vector<8x16xf32>
    %64 = vector.broadcast %3 : vector<8x1xf32> to vector<8x16xf32>
    %65 = arith.addf %63, %64 : vector<8x16xf32>
    %cst_32 = arith.constant 0.000000e+00 : f32
    %66 = vector.broadcast %cst_32 : f32 to vector<8x16xf32>
    %67 = arith.cmpf oge, %65, %66 : vector<8x16xf32>
    %cst_33 = arith.constant 0.00999999977 : f32
    %68 = vector.broadcast %cst_33 : f32 to vector<8x16xf32>
    %69 = arith.mulf %68, %65 : vector<8x16xf32>
    %70 = arith.select %67, %65, %69 : vector<8x16xi1>, vector<8x16xf32>
    %c1_34 = arith.constant 1 : index
    %c0_35 = arith.constant 0 : index
    %c0_36 = arith.constant 0 : index
    %71 = vector.load %arg6[%c1_34, %c0_35, %c0_36] : memref<2x8x16xf32, #tpu.memory_space<vmem>>, vector<1x8x16xf32>
    %72 = vector.shape_cast %71 : vector<1x8x16xf32> to vector<8x16xf32>
    %73 = vector.shape_cast %70 : vector<8x16xf32> to vector<1x8x16xf32>
    tpu.vector_store %arg6[%c1_34, %c0_35, %c0_36], %73 {strides = array<i32>} : memref<2x8x16xf32, #tpu.memory_space<vmem>>, vector<1x8x16xf32>,
    return
  }
  func.func @transform_0(%arg0: i32) -> (i32, i32, i32) {
    %c0_i32 = arith.constant 0 : i32
    %c0_i32_0 = arith.constant 0 : i32
    %c0_i32_1 = arith.constant 0 : i32
    return %arg0, %c0_i32, %c0_i32_0 : i32, i32, i32
  }
  func.func @transform_1(%arg0: i32) -> (i32, i32) {
    %c0_i32 = arith.constant 0 : i32
    %c0_i32_0 = arith.constant 0 : i32
    %c0_i32_1 = arith.constant 0 : i32
    return %c0_i32, %c0_i32_0 : i32, i32
  }
  func.func @transform_2(%arg0: i32) -> (i32, i32) {
    %c0_i32 = arith.constant 0 : i32
    %c0_i32_0 = arith.constant 0 : i32
    %c0_i32_1 = arith.constant 0 : i32
    return %c0_i32, %c0_i32_0 : i32, i32
  }
  func.func @transform_3(%arg0: i32) -> (i32, i32) {
    %c0_i32 = arith.constant 0 : i32
    %c0_i32_0 = arith.constant 0 : i32
    %c0_i32_1 = arith.constant 0 : i32
    return %c0_i32, %c0_i32_0 : i32, i32
  }
  func.func @transform_4(%arg0: i32) -> (i32, i32) {
    %c0_i32 = arith.constant 0 : i32
    %c0_i32_0 = arith.constant 0 : i32
    %c0_i32_1 = arith.constant 0 : i32
    return %c0_i32, %c0_i32_0 : i32, i32
  }
  func.func @transform_5(%arg0: i32) -> (i32, i32, i32) {
    %c0_i32 = arith.constant 0 : i32
    %c0_i32_0 = arith.constant 0 : i32
    %c0_i32_1 = arith.constant 0 : i32
    return %arg0, %c0_i32, %c0_i32_0 : i32, i32, i32
  }
}

</mosaic_0001>

<llo_original>
// kernel: resblk_pallas.1
$region0: #{resblk_pallas.1}
  #allocation0 [shape = 'u32[]', space=smem, size = 0x4, offset = 0x4, fixed_abs, tag = 'smem constant byte address 0x4 - core index']
  #allocation1 [shape = 'u32[72,128]{1,0:T(1,128)}', space=vmem, size = 0x9000, scoped, tag = 'internal scratch']
  %s0 = inlined_call_operand.vmem [shape: f32[2,4,16], index: 0, kind: input, shape index: {}]
  %s1 = inlined_call_operand.vmem [shape: f32[8,12], index: 1, kind: input, shape index: {}]
  %s2 = inlined_call_operand.vmem [shape: f32[8,1], index: 2, kind: input, shape index: {}]
  %s3 = inlined_call_operand.vmem [shape: f32[8,28], index: 3, kind: input, shape index: {}]
  %s4 = inlined_call_operand.vmem [shape: f32[8,1], index: 4, kind: input, shape index: {}]
  %s5 = inlined_call_operand.hbm [shape: f32[2,8,16], index: 5, kind: output, shape index: {}]
  %s6 = sld [smem:[#allocation0]]
  $region30: #{resblk_pallas.1} parent=0
    _
  %s8 = ssub.s32 1, %s6
  %s9 = scalar_select 0, %s8, %s6
  $region1: #{resblk_pallas.1} parent=0
    #allocation2 [shape = 'u8[8192]{0}', space=vmem, size = 0x2000, scoped, tag = 'output window, operand 0, single buffered']
    #allocation3 [shape = 's32[1]{0}', space=sflag, size = 0x4, scoped, tag = 'scoped memory for resblk_pallas.1']
    %10 = vsyncpa [#allocation3], 0
    // Predicated region
    $region2: #{resblk_pallas.1} parent=1 // pred_check
      _
    $region3: #{resblk_pallas.1} parent=1 // pred_check_branch
      %12 = sbr.rel (0) target = $region5
    $region4: #{resblk_pallas.1} parent=1 // pred_region
      _
    $region5: #{resblk_pallas.1} parent=1 // pred_fallthru
      _
    // Predicated region
    $region6: #{resblk_pallas.1} parent=1 // pred_check
      _
    $region7: #{resblk_pallas.1} parent=1 // pred_check_branch
      %14 = sbr.rel (0) target = $region9
    $region8: #{resblk_pallas.1} parent=1 // pred_region
      _
    $region9: #{resblk_pallas.1} parent=1 // pred_fallthru
      _
    // Predicated region
    $region10: #{resblk_pallas.1} parent=1 // pred_check
      _
    $region11: #{resblk_pallas.1} parent=1 // pred_check_branch
      %16 = sbr.rel (0) target = $region13
    $region12: #{resblk_pallas.1} parent=1 // pred_region
      _
    $region13: #{resblk_pallas.1} parent=1 // pred_fallthru
      _
    // Predicated region
    $region14: #{resblk_pallas.1} parent=1 // pred_check
      _
    $region15: #{resblk_pallas.1} parent=1 // pred_check_branch
      %18 = sbr.rel (0) target = $region17
    $region16: #{resblk_pallas.1} parent=1 // pred_region
      _
    $region17: #{resblk_pallas.1} parent=1 // pred_fallthru
      _
    // Predicated region
    $region18: #{resblk_pallas.1} parent=1 // pred_check
      _
    $region19: #{resblk_pallas.1} parent=1 // pred_check_branch
      %20 = sbr.rel (0) target = $region21
    $region20: #{resblk_pallas.1} parent=1 // pred_region
      _
    $region21: #{resblk_pallas.1} parent=1 // pred_fallthru
      _
    %v21 = vld [vmem:[%s1] sm:$0xff]
    %v22 = vld [vmem:[%s3] sm:$0xff]
    %v23 = vld [vmem:[%s2] sm:$0xff]
    %v24 = vld [vmem:[%s4] sm:$0xff]
    %v25 = vld [vmem:[%s0] sm:$0xf]
    %27 = vrot.lane.b32.xlu0 %v25, 1
    %v28 = vpop.permute.xlu0 %27
    %vm30 = vcmask 7168
    %v31 = vsel %vm30, 0.0, %v28
    %32 = vrot.lane.b32.xlu0 %v25, 127
    %v33 = vpop.permute.xlu0 %32
    %vm35 = vcmask 121856
    %v36 = vsel %vm35, %v33, 0.0
    %v37 = vrot.slane %v25, 4
    %vm39 = vcmask 1043456
    %v40 = vsel %vm39, %v31, %v37
    %42 = vset.pattern.permute.xlu0 0
    %43 = vperm.xlu0 %42, %v23
    %v44 = vpop.permute.xlu0 %43
    %vm46 = vcmask 97280
    %v48 = vsel %vm46, %v21, 0
    %v51 = vsel %vm39, %v36, 0
    %53 = vmatpush.msra.mxu0 0.0
    %54 = vmatpush.msra.mxu0 0.0
    %55 = vmatpush.msra.mxu0 0.0
    %56 = vmatpush.msra.mxu0 0.0
    %57 = vmatpush.msra.mxu0 0.0
    %58 = vmatpush.msra.mxu0 0.0
    %59 = vmatpush.msra.mxu0 0.0
    %60 = vmatpush.msra.mxu0 0.0
    %61 = vmatpush.msra.mxu0 0.0
    %62 = vmatpush.msra.mxu0 0.0
    %63 = vmatpush.msra.mxu0 0.0
    %64 = vmatpush.msra.mxu0 0.0
    %65 = vmatpush.msra.mxu0 0.0
    %66 = vmatpush.msra.mxu0 0.0
    %67 = vmatpush.msra.mxu0 %v51
    %68 = vmatpush.msra.mxu0 %v40
    %69 = vmatmul.f32.gmra.mxu0 %v48
    %v70 = vpop.f32.mrf.mxu0
    %v71 = vadd.f32 %v44, %v70
    %72 = vdwg.mxu0
    %vm73 = vcmp.ge.f32.partialorder %v71, 0.0
    %v74 = vmul.f32 %v71, 0.01
    %v75 = vsel %vm73, %v71, %v74
    %77 = vrot.lane.b32.xlu0 %v75, 1
    %v78 = vpop.permute.xlu0 %77
    %v80 = vsel %vm30, 0.0, %v78
    %81 = vrot.lane.b32.xlu0 %v75, 127
    %v82 = vpop.permute.xlu0 %81
    %v84 = vsel %vm35, %v82, 0.0
    %86 = vset.pattern.permute.xlu0 0
    %87 = vperm.xlu0 %86, %v24
    %v88 = vpop.permute.xlu0 %87
    %vm90 = vcmask 228352
    %v92 = vsel %vm90, %v22, 0
    %v94 = vsel %vm39, %v25, 0
    %96 = vmatpush.msra.mxu0 0.0
    %97 = vmatpush.msra.mxu0 0.0
    %98 = vmatpush.msra.mxu0 0.0
    %99 = vmatpush.msra.mxu0 0.0
    %100 = vmatpush.msra.mxu0 0.0
    %101 = vmatpush.msra.mxu0 0.0
    %102 = vmatpush.msra.mxu0 0.0
    %103 = vmatpush.msra.mxu0 0.0
    %104 = vmatpush.msra.mxu0 0.0
    %105 = vmatpush.msra.mxu0 0.0
    %106 = vmatpush.msra.mxu0 0.0
    %107 = vmatpush.msra.mxu0 0.0
    %108 = vmatpush.msra.mxu0 %v94
    %109 = vmatpush.msra.mxu0 %v84
    %110 = vmatpush.msra.mxu0 %v75
    %111 = vmatpush.msra.mxu0 %v80
    %112 = vmatmul.f32.gmra.mxu0 %v92
    %v113 = vpop.f32.mrf.mxu0
    %v114 = vadd.f32 %v88, %v113
    %115 = vdwg.mxu0
    %vm116 = vcmp.ge.f32.partialorder %v114, 0.0
    %v117 = vmul.f32 %v114, 0.01
    %v118 = vsel %vm116, %v114, %v117
    %vm119 = vcmask 130048
    %120 = vst.msk [vmem:[#allocation2] sm:$0xff] %vm119, %v118
    %s121 = scalar_lea.vmem %s0, 4
    %v122 = vld [vmem:[%s121] sm:$0xf]
    %124 = vrot.lane.b32.xlu0 %v122, 1
    %v125 = vpop.permute.xlu0 %124
    %v127 = vsel %vm30, 0.0, %v125
    %128 = vrot.lane.b32.xlu0 %v122, 127
    %v129 = vpop.permute.xlu0 %128
    %v131 = vsel %vm35, %v129, 0.0
    %v132 = vrot.slane %v122, 4
    %v134 = vsel %vm39, %v127, %v132
    %v136 = vsel %vm39, %v131, 0
    %138 = vmatpush.msra.mxu0 0.0
    %139 = vmatpush.msra.mxu0 0.0
    %140 = vmatpush.msra.mxu0 0.0
    %141 = vmatpush.msra.mxu0 0.0
    %142 = vmatpush.msra.mxu0 0.0
    %143 = vmatpush.msra.mxu0 0.0
    %144 = vmatpush.msra.mxu0 0.0
    %145 = vmatpush.msra.mxu0 0.0
    %146 = vmatpush.msra.mxu0 0.0
    %147 = vmatpush.msra.mxu0 0.0
    %148 = vmatpush.msra.mxu0 0.0
    %149 = vmatpush.msra.mxu0 0.0
    %150 = vmatpush.msra.mxu0 0.0
    %151 = vmatpush.msra.mxu0 0.0
    %152 = vmatpush.msra.mxu0 %v136
    %153 = vmatpush.msra.mxu0 %v134
    %154 = vmatmul.f32.gmra.mxu0 %v48
    %v155 = vpop.f32.mrf.mxu0
    %v156 = vadd.f32 %v44, %v155
    %157 = vdwg.mxu0
    %vm158 = vcmp.ge.f32.partialorder %v156, 0.0
    %v159 = vmul.f32 %v156, 0.01
    %v160 = vsel %vm158, %v156, %v159
    %162 = vrot.lane.b32.xlu0 %v160, 1
    %v163 = vpop.permute.xlu0 %162
    %v165 = vsel %vm30, 0.0, %v163
    %166 = vrot.lane.b32.xlu0 %v160, 127
    %v167 = vpop.permute.xlu0 %166
    %v169 = vsel %vm35, %v167, 0.0
    %v170 = vsel %vm39, %v122, 0
    %172 = vmatpush.msra.mxu0 0.0
    %173 = vmatpush.msra.mxu0 0.0
    %174 = vmatpush.msra.mxu0 0.0
    %175 = vmatpush.msra.mxu0 0.0
    %176 = vmatpush.msra.mxu0 0.0
    %177 = vmatpush.msra.mxu0 0.0
    %178 = vmatpush.msra.mxu0 0.0
    %179 = vmatpush.msra.mxu0 0.0
    %180 = vmatpush.msra.mxu0 0.0
    %181 = vmatpush.msra.mxu0 0.0
    %182 = vmatpush.msra.mxu0 0.0
    %183 = vmatpush.msra.mxu0 0.0
    %184 = vmatpush.msra.mxu0 %v170
    %185 = vmatpush.msra.mxu0 %v169
    %186 = vmatpush.msra.mxu0 %v160
    %187 = vmatpush.msra.mxu0 %v165
    %188 = vmatmul.f32.gmra.mxu0 %v92
    %v189 = vpop.f32.mrf.mxu0
    %v190 = vadd.f32 %v88, %v189
    %191 = vdwg.mxu0
    %vm192 = vcmp.ge.f32.partialorder %v190, 0.0
    %v193 = vmul.f32 %v190, 0.01
    %v194 = vsel %vm192, %v190, %v193
    %s195 = scalar_lea.vmem [#allocation2], 8
    %196 = vst.msk [vmem:[%s195] sm:$0xff] %vm119, %v194
    // Predicated region
    $region22: #{resblk_pallas.1} parent=1 // pred_check
      _
    $region23: #{resblk_pallas.1} parent=1 // pred_check_branch
      %198 = sbr.rel (0) target = $region25
    $region24: #{resblk_pallas.1} parent=1 // pred_region
      %200 = vsyncadd [#allocation3], 0
      %s201 = sshll.u32 [#allocation2], 4
      %s202 = int_to_ptr.vmem [resolvable:$true] %s201
      %s203 = sshll.u32 %s5, 4
      %s204 = int_to_ptr.hbm [resolvable:$true] %s203
      %209 = dma.vmem_to_hbm [thread:$0]  %s202, 256, %s204, [#allocation3], 128, 128, 8
    $region25: #{resblk_pallas.1} parent=1 // pred_fallthru
      _
    // Predicated region
    $region26: #{resblk_pallas.1} parent=1 // pred_check
      _
    $region27: #{resblk_pallas.1} parent=1 // pred_check_branch
      %211 = sbr.rel (0) target = $region29
    $region28: #{resblk_pallas.1} parent=1 // pred_region
      %213 = dma.done [#allocation3], 256
    $region29: #{resblk_pallas.1} parent=1 // pred_fallthru
      _
    %214 = vsyncpa [#allocation3], 1

</llo_original>
